<compile_context>
chip_gen: v7x
topology: tpu7x:2x2x1
jax: 0.10.0
libtpu: 0.0.40
codegen_flags: <defaults>
</compile_context>

<pallas_src>
import functools

import jax
import jax.numpy as jnp
from jax.experimental import pallas as pl
from jax.experimental.pallas import tpu as pltpu

_LANE = 128
_SUBLANE = 8
_BLOCK_BYTES_SUM = 4 * 1024 * 1024    # per-input block bytes, mean/sum path (2 streams)
_BLOCK_BYTES_NONE = 2 * 1024 * 1024   # per-stream block bytes, 'none' path (3 streams)
_VMEM_LIMIT = 32 * 1024 * 1024        # safe on v5e/v6e (128 MiB phys) and v7x (64 MiB phys)


def _l1_block_sum_kernel(p_ref, t_ref, o_ref, *, total_rows, block_rows, needs_mask):
    """Per-block partial sum of |p - t| into a (1, 8, 128) f32 vector."""
    d = jnp.abs(p_ref[...].astype(jnp.float32) - t_ref[...].astype(jnp.float32))
    if needs_mask:
        # Only the last block can be ragged; zero its stale out-of-range rows.
        valid = total_rows - pl.program_id(0) * block_rows
        row_ids = jax.lax.broadcasted_iota(jnp.int32, d.shape, 0)
        d = jnp.where(row_ids < valid, d, 0.0)
    # (block_rows, 128) -> (block_rows//8, 8, 128); the leading-axis sum is
    # plain VPU vreg adds.  The single cross-lane/sublane reduce happens once,
    # outside the kernel, over the tiny partials array.
    o_ref[...] = d.reshape(-1, _SUBLANE, _LANE).sum(axis=0, keepdims=True)


def _l1_abs_kernel(p_ref, t_ref, o_ref, *, scale, llv):
    """reduction='none' path: per-element |p - t| with fused scalar epilogue."""
    v = jnp.abs(p_ref[...].astype(jnp.float32) - t_ref[...].astype(jnp.float32))
    if scale != 1.0:
        v = v * jnp.float32(scale)
    if llv is not None:
        low = jnp.float32(llv)
        v = jnp.abs(v - low) + low
    o_ref[...] = v.astype(o_ref.dtype)


def _as_lane_slab(x):
    """Flatten to (rows, 128).  Free reshape when numel % 128 == 0; otherwise a
    single small zero-pad copy (only for awkward sizes)."""
    flat = x.reshape(-1)
    n = flat.shape[0]
    if n % _LANE == 0:
        return flat.reshape(n // _LANE, _LANE), n, False
    rows = -(-n // _LANE)  # ceil
    padded = jnp.zeros((rows * _LANE,), dtype=x.dtype).at[:n].set(flat)
    return padded.reshape(rows, _LANE), n, True


def _block_geometry(rows, itemsize, budget_bytes):
    """Row-tile height: multiple of the dtype's sublane packing (8/16/32 for
    4/2/1-byte dtypes), sized to a per-stream byte budget, and capped near
    rows/2 so the 'parallel' grid has >= 2 steps when possible (lets v7x shard
    the stream across both TensorCores).  Returns 0 for tiny inputs."""
    pack = max(1, 4 // min(int(itemsize), 4))
    mult = _SUBLANE * pack
    if rows < mult:
        return 0
    cap = max(mult, (budget_bytes // (_LANE * int(itemsize))) // mult * mult)
    half = max(mult, (rows // 2) // mult * mult)
    return min(cap, half)


@functools.partial(
    jax.jit, static_argnames=("scale_factor", "reduction", "lowest_loss_value"))
def l1_loss(prediction, target, scale_factor=1.0, reduction="mean",
            lowest_loss_value=None):
    assert prediction.shape == target.shape
    target = target.astype(prediction.dtype)
    in_dtype = prediction.dtype
    itemsize = jnp.dtype(in_dtype).itemsize

    p2d, n, was_padded = _as_lane_slab(prediction)
    t2d, _, _ = _as_lane_slab(target)
    rows = p2d.shape[0]

    cparams = pltpu.CompilerParams(dimension_semantics=("parallel",),
                                   vmem_limit_bytes=_VMEM_LIMIT)

    if reduction == "none":
        scale = float(scale_factor)
        llv = None if lowest_loss_value is None else float(lowest_loss_value)
        block_rows = _block_geometry(rows, itemsize, _BLOCK_BYTES_NONE)
        if block_rows:
            grid = pl.cdiv(rows, block_rows)
            io_spec = pl.BlockSpec((block_rows, _LANE), lambda i: (i, 0))
            kern = functools.partial(_l1_abs_kernel, scale=scale, llv=llv)
            out2d = pl.pallas_call(
                kern,
                out_shape=jax.ShapeDtypeStruct((rows, _LANE), in_dtype),
                grid_spec=pltpu.PrefetchScalarGridSpec(
                    num_scalar_prefetch=0,
                    grid=(grid,),
                    in_specs=[io_spec, io_spec],
                    out_specs=io_spec,
                ),
                compiler_params=cparams,
            )(p2d, t2d)
        else:
            # Tiny input (< one sublane-packed row group): plain JAX.
            v = jnp.abs(p2d.astype(jnp.float32) - t2d.astype(jnp.float32))
            if scale != 1.0:
                v = v * jnp.float32(scale)
            if llv is not None:
                low = jnp.float32(llv)
                v = jnp.abs(v - low) + low
            out2d = v.astype(in_dtype)
        flat = out2d.reshape(-1)
        if was_padded:
            flat = flat[:n]
        return flat.reshape(prediction.shape)

    if reduction not in ("mean", "sum"):
        raise ValueError(f"unknown reduction: {reduction}")

    block_rows = _block_geometry(rows, itemsize, _BLOCK_BYTES_SUM)
    if block_rows:
        grid = pl.cdiv(rows, block_rows)
        io_spec = pl.BlockSpec((block_rows, _LANE), lambda i: (i, 0))
        kern = functools.partial(_l1_block_sum_kernel,
                                 total_rows=rows,
                                 block_rows=block_rows,
                                 needs_mask=(rows % block_rows != 0))
        partials = pl.pallas_call(
            kern,
            out_shape=jax.ShapeDtypeStruct((grid, _SUBLANE, _LANE), jnp.float32),
            grid_spec=pltpu.PrefetchScalarGridSpec(
                num_scalar_prefetch=0,
                grid=(grid,),
                in_specs=[io_spec, io_spec],
                out_specs=pl.BlockSpec((1, _SUBLANE, _LANE),
                                       lambda i: (i, 0, 0)),
            ),
            compiler_params=cparams,
        )(p2d, t2d)
        total = jnp.sum(partials)
    else:
        total = jnp.sum(jnp.abs(p2d.astype(jnp.float32)
                                - t2d.astype(jnp.float32)))

    # Zero lane-padding contributes 0 to the sum; divide by the true element
    # count for 'mean'.  Keep the whole scalar epilogue in f32, cast once.
    loss = total / jnp.float32(n) if reduction == "mean" else total
    loss = loss * jnp.float32(scale_factor)
    if lowest_loss_value is not None:
        low = jnp.float32(lowest_loss_value)
        loss = jnp.abs(loss - low) + low
    return loss.astype(in_dtype)


if __name__ == "__main__":
    key = jax.random.PRNGKey(0)
    k1, k2, k3, k4 = jax.random.split(key, 4)

    # NCHW inputs, matching the PyTorch module's expected layout.
    shape = (2, 4, 16, 16)
    prediction = jax.random.normal(k1, shape, dtype=jnp.float32)
    target = jax.random.normal(k2, shape, dtype=jnp.float32)

    # Default module config: scale_factor=1.0, reduction='mean', lowest_loss_value=None
    loss = jax.block_until_ready(l1_loss(prediction, target))
    ref = jnp.mean(jnp.abs(prediction - target))
    assert jnp.allclose(loss, ref, rtol=1e-5, atol=1e-6), (loss, ref)

    # reduction='none' (scale_factor fused into the elementwise kernel).
    loss_none = jax.block_until_ready(
        l1_loss(prediction, target, scale_factor=0.5, reduction="none"))
    ref_none = jnp.abs(prediction - target) * 0.5
    assert jnp.allclose(loss_none, ref_none, rtol=1e-5, atol=1e-6)

    # reduction='sum' with scale_factor and lowest_loss_value epilogue.
    loss_sum = jax.block_until_ready(
        l1_loss(prediction, target, scale_factor=0.25, reduction="sum",
                lowest_loss_value=1.0))
    ref_sum = jnp.sum(jnp.abs(prediction - target)) * 0.25
    ref_sum = jnp.abs(ref_sum - 1.0) + 1.0
    assert jnp.allclose(loss_sum, ref_sum, rtol=1e-5, atol=1e-5), (loss_sum, ref_sum)

    # Awkward size: numel % 128 != 0 and rows % block_rows != 0
    # (exercises lane padding + masked ragged boundary block).
    shape2 = (3, 5, 7, 11)
    p2 = jax.random.normal(k3, shape2, dtype=jnp.float32)
    t2 = jax.random.normal(k4, shape2, dtype=jnp.float32)
    l2 = jax.block_until_ready(l1_loss(p2, t2, reduction="mean"))
    r2 = jnp.mean(jnp.abs(p2 - t2))
    assert jnp.allclose(l2, r2, rtol=1e-5, atol=1e-6), (l2, r2)
    l2n = jax.block_until_ready(l1_loss(p2, t2, reduction="none"))
    r2n = jnp.abs(p2 - t2)
    assert jnp.allclose(l2n, r2n, rtol=1e-5, atol=1e-6)

    # bf16 path (checks the dtype-aware sublane-packing block geometry).
    pb = prediction.astype(jnp.bfloat16)
    tb = target.astype(jnp.bfloat16)
    lb = jax.block_until_ready(l1_loss(pb, tb, reduction="none"))
    rb = jnp.abs(pb.astype(jnp.float32) - tb.astype(jnp.float32)).astype(jnp.bfloat16)
    assert jnp.allclose(lb.astype(jnp.float32), rb.astype(jnp.float32),
                        rtol=1e-2, atol=1e-2)

    print("KERNEL_OK")
</pallas_src>

<mosaic_0001>
module attributes {stable_mosaic.version = 11 : i64} {
  func.func @_l1_block_sum_kernel(%arg0: i32, %arg1: memref<8x128xf32, #tpu.memory_space<vmem>>, %arg2: memref<8x128xf32, #tpu.memory_space<vmem>>, %arg3: memref<1x8x128xf32, #tpu.memory_space<vmem>>) attributes {dimension_semantics = [#tpu.dimension_semantics<parallel>], iteration_bounds = array<i64: 2>, scalar_prefetch = 0 : i64, scratch_operands = 0 : i64, tpu.core_type = #tpu.core_type<tc>, window_params = [{transform_indices = @transform_0, window_bounds = array<i64: 8, 128>}, {transform_indices = @transform_1, window_bounds = array<i64: 8, 128>}, {transform_indices = @transform_2, window_bounds = array<i64: 1, 8, 128>}]} {
    %c0 = arith.constant 0 : index
    %c0_0 = arith.constant 0 : index
    %0 = vector.load %arg1[%c0, %c0_0] : memref<8x128xf32, #tpu.memory_space<vmem>>, vector<8x128xf32>
    %c0_1 = arith.constant 0 : index
    %c0_2 = arith.constant 0 : index
    %1 = vector.load %arg2[%c0_1, %c0_2] : memref<8x128xf32, #tpu.memory_space<vmem>>, vector<8x128xf32>
    %2 = arith.subf %0, %1 : vector<8x128xf32>
    %3 = math.absf %2 : vector<8x128xf32>
    %4 = vector.shape_cast %3 : vector<8x128xf32> to vector<1x8x128xf32>
    %cst = arith.constant dense<0.000000e+00> : vector<8x128xf32>
    %5 = vector.multi_reduction <add>, %4, %cst [0] : vector<1x8x128xf32> to vector<8x128xf32>
    %6 = vector.shape_cast %5 : vector<8x128xf32> to vector<1x8x128xf32>
    %c0_3 = arith.constant 0 : index
    %c0_4 = arith.constant 0 : index
    %c0_5 = arith.constant 0 : index
    %7 = vector.load %arg3[%c0_3, %c0_4, %c0_5] : memref<1x8x128xf32, #tpu.memory_space<vmem>>, vector<1x8x128xf32>
    tpu.vector_store %arg3[%c0_3, %c0_4, %c0_5], %6 {strides = array<i32>} : memref<1x8x128xf32, #tpu.memory_space<vmem>>, vector<1x8x128xf32>,
    return
  }
  func.func @transform_0(%arg0: i32) -> (i32, i32) {
    %c0_i32 = arith.constant 0 : i32
    %c0_i32_0 = arith.constant 0 : i32
    return %arg0, %c0_i32 : i32, i32
  }
  func.func @transform_1(%arg0: i32) -> (i32, i32) {
    %c0_i32 = arith.constant 0 : i32
    %c0_i32_0 = arith.constant 0 : i32
    return %arg0, %c0_i32 : i32, i32
  }
  func.func @transform_2(%arg0: i32) -> (i32, i32, i32) {
    %c0_i32 = arith.constant 0 : i32
    %c0_i32_0 = arith.constant 0 : i32
    %c0_i32_1 = arith.constant 0 : i32
    return %arg0, %c0_i32, %c0_i32_0 : i32, i32, i32
  }
}

</mosaic_0001>

<llo_original>
// kernel: l1_loss.1
$region0: #{l1_loss.1}
  #allocation0 [shape = 'u32[]', space=smem, size = 0x4, offset = 0x4, fixed_abs, tag = 'smem constant byte address 0x4 - core index']
  #allocation1 [shape = 'u32[144,128]{1,0:T(1,128)}', space=vmem, size = 0x12000, scoped, tag = 'internal scratch']
  %s0 = inlined_call_operand.vmem [shape: f32[16,128], index: 0, kind: input, shape index: {}]
  %s1 = inlined_call_operand.vmem [shape: f32[16,128], index: 1, kind: input, shape index: {}]
  %s2 = inlined_call_operand.vmem [shape: f32[2,8,128], index: 2, kind: output, shape index: {}]
  %s3 = sld [smem:[#allocation0]]
  $region41: #{l1_loss.1} parent=0
    _
  %s5 = ssub.s32 1, %s3
  %s6 = scalar_select 0, %s5, %s3
  loop: start=0, step=1, limit=4
  $region2: #{l1_loss.1} parent=0 // loop_pre_header
    _
  $region3: #{l1_loss.1} parent=0 // loop_header
    %s8 = sphi 0, %s12
    %p9 = scmp.ge.s32.totalorder %s8, 4
    %s18 = sphi 0, %s20
    %s21 = sphi 0, %s18
    %s22 = sphi 0, %s21
    %s38 = sphi 0, %s22
    %s44 = sphi 0, %s46
    %s47 = sphi 0, %s44
    %s48 = sphi 0, %s47
    %s64 = sphi 0, %s48
    %s70 = sphi 0, %s72
    %s73 = sphi 0, %s70
    %s74 = sphi 0, %s73
    %s90 = sphi 0, %s74
  $region4: #{l1_loss.1} parent=0 // loop_header_branch
    %11 = sbr.rel (%p9) target = $region8
  $region5: #{l1_loss.1} parent=0 // loop_body
    %s13 = ssub.s32 %s8, 1
    %s14 = ssub.s32 %s8, 2
    %s15 = sadd.s32 %s8, 1
    %s16 = ssub.s32 %s8, %s15
    %p17 = scmp.eq.s32.totalorder %s16, 0
    %s19 = sadd.s32 %s18, 1
    %s20 = scalar_select %p17, %s18, %s19
    %p23 = pneg %p17
    %p24 = scmp.eq.s32.totalorder %s8, 1
    %p25 = por %p23, %p24
    %p26 = scmp.ne.s32.totalorder %s18, %s21
    %p27 = scmp.eq.s32.totalorder %s8, 0
    %p28 = por %p26, %p27
    %p29 = scmp.ne.s32.totalorder %s18, %s21
    %p30 = scmp.eq.s32.totalorder %s13, 1
    %p31 = por %p29, %p30
    %p32 = scmp.ne.s32.totalorder %s21, %s22
    %p33 = scmp.eq.s32.totalorder %s13, 0
    %p34 = por %p32, %p33
    %p35 = scmp.ne.s32.totalorder %s21, %s22
    %p36 = scmp.eq.s32.totalorder %s14, 1
    %p37 = por %p35, %p36
    %p39 = scmp.ne.s32.totalorder %s22, %s38
    %p40 = scmp.eq.s32.totalorder %s14, 0
    %p41 = por %p39, %p40
    %s42 = ssub.s32 %s8, %s15
    %p43 = scmp.eq.s32.totalorder %s42, 0
    %s45 = sadd.s32 %s44, 1
    %s46 = scalar_select %p43, %s44, %s45
    %p49 = pneg %p43
    %p50 = scmp.eq.s32.totalorder %s8, 1
    %p51 = por %p49, %p50
    %p52 = scmp.ne.s32.totalorder %s44, %s47
    %p53 = scmp.eq.s32.totalorder %s8, 0
    %p54 = por %p52, %p53
    %p55 = scmp.ne.s32.totalorder %s44, %s47
    %p56 = scmp.eq.s32.totalorder %s13, 1
    %p57 = por %p55, %p56
    %p58 = scmp.ne.s32.totalorder %s47, %s48
    %p59 = scmp.eq.s32.totalorder %s13, 0
    %p60 = por %p58, %p59
    %p61 = scmp.ne.s32.totalorder %s47, %s48
    %p62 = scmp.eq.s32.totalorder %s14, 1
    %p63 = por %p61, %p62
    %p65 = scmp.ne.s32.totalorder %s48, %s64
    %p66 = scmp.eq.s32.totalorder %s14, 0
    %p67 = por %p65, %p66
    %s68 = ssub.s32 %s8, %s15
    %p69 = scmp.eq.s32.totalorder %s68, 0
    %s71 = sadd.s32 %s70, 1
    %s72 = scalar_select %p69, %s70, %s71
    %p75 = pneg %p69
    %p76 = scmp.eq.s32.totalorder %s8, 1
    %p77 = por %p75, %p76
    %p78 = scmp.ne.s32.totalorder %s70, %s73
    %p79 = scmp.eq.s32.totalorder %s8, 0
    %p80 = por %p78, %p79
    %p81 = scmp.ne.s32.totalorder %s70, %s73
    %p82 = scmp.eq.s32.totalorder %s13, 1
    %p83 = por %p81, %p82
    %p84 = scmp.ne.s32.totalorder %s73, %s74
    %p85 = scmp.eq.s32.totalorder %s13, 0
    %p86 = por %p84, %p85
    %p87 = scmp.ne.s32.totalorder %s73, %s74
    %p88 = scmp.eq.s32.totalorder %s14, 1
    %p89 = por %p87, %p88
    %p91 = scmp.ne.s32.totalorder %s74, %s90
    %p92 = scmp.eq.s32.totalorder %s14, 0
    %p93 = por %p91, %p92
    %p94 = scmp.le.s32.totalorder 1, %s8
    %p95 = scmp.lt.s32.totalorder %s8, 3
    %p96 = pnand %p94, %p95
    %p97 = pneg %p96
    // Predicated region
    $region9: #{l1_loss.1} parent=5 // pred_check
      _
    $region10: #{l1_loss.1} parent=5 // pred_check_branch
      %99 = sbr.rel (%p96) target = $region12
    $region11: #{l1_loss.1} parent=5 // pred_region
      %s100 = ssub.s32 %s8, 1
    $region12: #{l1_loss.1} parent=5 // pred_fallthru
      _
    %p101 = scmp.lt.s32.totalorder %s8, 2
    // Predicated region
    $region13: #{l1_loss.1} parent=5 // pred_check
      %p102 = pneg %p101
    $region14: #{l1_loss.1} parent=5 // pred_check_branch
      %104 = sbr.rel (%p102) target = $region16
    $region15: #{l1_loss.1} parent=5 // pred_region
      // Predicated region
      $region17: #{l1_loss.1} parent=15 // pred_check
        %p105 = pneg %p28
      $region18: #{l1_loss.1} parent=15 // pred_check_branch
        %107 = sbr.rel (%p105) target = $region20
      $region19: #{l1_loss.1} parent=15 // pred_region
        %p108 = scmp.lt.s32.totalorder %s8, 1
        %s109 = scalar_select %p108, %s8, 1
        %s110 = smul.addr %s109, 8
        %s111 = scalar_lea.vmem %s0, %s110
      $region20: #{l1_loss.1} parent=15 // pred_fallthru
        _
      // Predicated region
      $region21: #{l1_loss.1} parent=15 // pred_check
        %p112 = pneg %p54
      $region22: #{l1_loss.1} parent=15 // pred_check_branch
        %114 = sbr.rel (%p112) target = $region24
      $region23: #{l1_loss.1} parent=15 // pred_region
        %p115 = scmp.lt.s32.totalorder %s8, 1
        %s116 = scalar_select %p115, %s8, 1
        %s117 = smul.addr %s116, 8
        %s118 = scalar_lea.vmem %s1, %s117
      $region24: #{l1_loss.1} parent=15 // pred_fallthru
        _
    $region16: #{l1_loss.1} parent=5 // pred_fallthru
      _
    %p119 = scmp.le.s32.totalorder 1, %s8
    %p120 = scmp.lt.s32.totalorder %s8, 3
    %p121 = pnand %p119, %p120
    %p122 = pneg %p121
    // Predicated region
    $region25: #{l1_loss.1} parent=5 // pred_check
      _
    $region26: #{l1_loss.1} parent=5 // pred_check_branch
      %124 = sbr.rel (%p121) target = $region28
    $region27: #{l1_loss.1} parent=5 // pred_region
      %s125 = ssub.s32 %s8, 1
      %p126 = scmp.lt.s32.totalorder %s13, 1
      %s127 = scalar_select %p126, %s13, 1
      %s128 = smul.addr %s127, 8
      %s129 = scalar_lea.vmem %s0, %s128
      %p130 = pneg %p34
      %p131 = pneg %p31
      %p132 = scmp.lt.s32.totalorder %s13, 1
      %s133 = scalar_select %p132, %s13, 1
      %s134 = smul.addr %s133, 8
      %s135 = scalar_lea.vmem %s1, %s134
      %p136 = pneg %p60
      %p137 = pneg %p57
      %p138 = pneg %p86
      %p139 = pneg %p83
      %p140 = scmp.lt.s32.totalorder %s13, 1
      %s141 = scalar_select %p140, %s13, 1
      %s142 = smul.addr %s141, 8
      %s143 = scalar_lea.vmem %s2, %s142
      %p144 = scmp.lt.s32.totalorder %s13, 1
      %s145 = scalar_select %p144, %s13, 1
      %s146 = smul.addr %s145, 8
      %s147 = scalar_lea.vmem %s0, %s146
      %p148 = scmp.lt.s32.totalorder %s13, 1
      %s149 = scalar_select %p148, %s13, 1
      %s150 = smul.addr %s149, 8
      %s151 = scalar_lea.vmem %s1, %s150
      %p152 = scmp.lt.s32.totalorder %s13, 1
      %s153 = scalar_select %p152, %s13, 1
      %s154 = smul.addr %s153, 8
      %s155 = scalar_lea.vmem %s2, %s154
      %v156 = vld [vmem:[%s147] sm:$0xff]
      %v157 = vld [vmem:[%s151] sm:$0xff]
      %v158 = vsub.f32 %v156, %v157
      %v159 = vand.u32 2147483647, %v158
      %v160 = vadd.f32 %v159, 0.0
      %161 = vst [vmem:[%s155] sm:$0xff] %v160
      %p162 = scmp.lt.s32.totalorder %s13, 1
      %s163 = scalar_select %p162, %s13, 1
      %s164 = smul.addr %s163, 8
      %s165 = scalar_lea.vmem %s2, %s164
      // Predicated region
      $region29: #{l1_loss.1} parent=27 // pred_check
        %p166 = pneg %p83
      $region30: #{l1_loss.1} parent=27 // pred_check_branch
        %168 = sbr.rel (%p166) target = $region32
      $region31: #{l1_loss.1} parent=27 // pred_region
        _
      $region32: #{l1_loss.1} parent=27 // pred_fallthru
        _
    $region28: #{l1_loss.1} parent=5 // pred_fallthru
      _
    %p169 = scmp.le.s32.totalorder 2, %s8
    // Predicated region
    $region33: #{l1_loss.1} parent=5 // pred_check
      %p170 = pneg %p169
    $region34: #{l1_loss.1} parent=5 // pred_check_branch
      %172 = sbr.rel (%p170) target = $region36
    $region35: #{l1_loss.1} parent=5 // pred_region
      %s173 = ssub.s32 %s8, 2
      // Predicated region
      $region37: #{l1_loss.1} parent=35 // pred_check
        %p174 = pneg %p89
      $region38: #{l1_loss.1} parent=35 // pred_check_branch
        %176 = sbr.rel (%p174) target = $region40
      $region39: #{l1_loss.1} parent=35 // pred_region
        %p177 = scmp.lt.s32.totalorder %s14, 1
        %s178 = scalar_select %p177, %s14, 1
        %s179 = smul.addr %s178, 8
        %s180 = scalar_lea.vmem %s2, %s179
      $region40: #{l1_loss.1} parent=35 // pred_fallthru
        _
    $region36: #{l1_loss.1} parent=5 // pred_fallthru
      _
  $region6: #{l1_loss.1} parent=0 // loop_footer
    %s12 = sadd.s32 1, %s8
  $region7: #{l1_loss.1} parent=0 // loop_footer_branch
    %7 = sbr.rel target = $region3
  $region8: #{l1_loss.1} parent=0 // loop_exit
    _

</llo_original>
